<compile_context>
chip_gen: v6e
topology: v6e:2x2x1
jax: 0.10.0
libtpu: 0.0.40
codegen_flags: <defaults>
</compile_context>

<pallas_src>
import jax
import jax.numpy as jnp
from jax.experimental import pallas as pl
from jax.experimental.pallas import tpu as pltpu

LN_EPS = 1e-5


def _patch_merge_kernel(x_ref, ga_ref, gb_ref, ba_ref, bb_ref,
                        wa_ref, wb_ref, o_ref):
    # x_ref : (TH, 2, W2, 2C)  axis 1: 0 = even rows -> [x1 | x3]
    #                                  1 = odd  rows -> [x2 | x4]
    # ga/gb, ba/bb : (1, 2C)   permuted LayerNorm gamma / beta halves
    # wa/wb        : (2C, Cout) permuted reduction-weight halves (matmul dtype)
    # o_ref        : (TH*W2, Cout)
    tm, _, w2, c2 = x_ref.shape
    rows = tm * w2

    x = x_ref[...]
    a = x[:, 0].astype(jnp.float32)    # (TH, W2, 2C) even-row slab
    b = x[:, 1].astype(jnp.float32)    # (TH, W2, 2C) odd-row slab

    # One-pass LayerNorm statistics over all 4C channels (both slabs jointly),
    # computed on the 3-D tile layout (no f32 repack).
    inv_n = 1.0 / (2.0 * c2)
    s = jnp.sum(a, axis=-1, keepdims=True) + jnp.sum(b, axis=-1, keepdims=True)
    ss = jnp.sum(a * a, axis=-1, keepdims=True) + jnp.sum(b * b, axis=-1, keepdims=True)
    mean = s * inv_n
    var = jnp.maximum(ss * inv_n - mean * mean, 0.0)
    rstd = jax.lax.rsqrt(var + LN_EPS)

    ga = ga_ref[...].astype(jnp.float32).reshape(1, 1, c2)
    gb = gb_ref[...].astype(jnp.float32).reshape(1, 1, c2)
    ba = ba_ref[...].astype(jnp.float32).reshape(1, 1, c2)
    bb = bb_ref[...].astype(jnp.float32).reshape(1, 1, c2)

    ya = (a - mean) * rstd * ga + ba
    yb = (b - mean) * rstd * gb + bb

    # Cast first, THEN do the single (TH, W2, 2C) -> (rows, 2C) repack so the
    # relayout moves bf16 bytes exactly once, right before the MXU.
    ya = ya.astype(wa_ref.dtype).reshape(rows, c2)
    yb = yb.astype(wb_ref.dtype).reshape(rows, c2)

    # Two K=2C matmuls with a f32 accumulator add (no concat into a 4C buffer).
    acc = jnp.dot(ya, wa_ref[...], preferred_element_type=jnp.float32)
    acc = acc + jnp.dot(yb, wb_ref[...], preferred_element_type=jnp.float32)
    o_ref[...] = acc.astype(o_ref.dtype)


def _physical_vmem_bytes():
    """Per-TensorCore physical VMEM; conservative (v7x-sized) fallback."""
    try:
        info = pltpu.get_tpu_info()
        cap = getattr(info, "vmem_capacity_bytes", None)
        if cap:
            return int(cap)
    except Exception:
        pass
    return 64 * 1024 * 1024


def _pick_row_block(n_row_blocks, w2, fits, min_big_rows=512):
    """Pick th | n_row_blocks s.t. the (th*W2, Cout) tile fits VMEM, the output
    rows stay sublane-aligned when grid > 1, preferring an even grid length
    (v7x 2-TC sharding) with >= min_big_rows rows, then the largest tile."""
    total_rows = n_row_blocks * w2
    big_rows = min(min_big_rows, max(total_rows // 2, 1))
    best, best_key = None, None
    for th in range(1, n_row_blocks + 1):
        if n_row_blocks % th:
            continue
        rows = th * w2
        grid = n_row_blocks // th
        if grid > 1 and rows % 8:
            continue                      # keep output stores sublane-aligned
        if not fits(th):
            continue
        even = (grid % 2 == 0)
        key = (rows >= big_rows and even, even, rows)
        if best_key is None or key > best_key:
            best, best_key = th, key
    if best is not None:
        return best
    # Nothing fits the budget: fall back to the smallest legal tile.
    for th in range(1, n_row_blocks + 1):
        if n_row_blocks % th == 0 and (n_row_blocks // th == 1 or (th * w2) % 8 == 0):
            return th
    return n_row_blocks


def patch_merging(x, patch_res, gamma, beta, weight, *,
                  matmul_dtype=jnp.bfloat16, target_tile_rows=512):
    """x: (B, H*W, C); gamma/beta: (4C,); weight: (4C, 2C). Returns (B, H*W/4, 2C).

    Note: the projection runs bf16-in / f32-accumulate on the MXU (and the
    output uses x.dtype), so results differ slightly from a pure-f32 Linear.
    """
    B, L, C = x.shape
    H, W = patch_res
    assert L == H * W, "input does not match the configured patch resolution"
    assert H % 2 == 0 and W % 2 == 0, "patch resolution must be even"
    H2, W2 = H // 2, W // 2
    C2, C4, Cout = 2 * C, 4 * C, 2 * C

    # Layout-only reshape (no gather, no extra HBM pass):
    #   x6[b*H2 + h2, pr, w2, pc*C + c] == x[b, 2*h2 + pr, 2*w2 + pc, c]
    x6 = x.reshape(B * H2, 2, W2, C2)

    # Fold the torch.cat([x1, x2, x3, x4]) channel order into the parameters.
    # even rows -> [x1 | x3] -> reference channels [0:C] ++ [2C:3C]
    # odd  rows -> [x2 | x4] -> reference channels [C:2C] ++ [3C:4C]
    g = gamma.astype(jnp.float32)
    bt = beta.astype(jnp.float32)
    w = weight.astype(matmul_dtype)
    ga = jnp.concatenate([g[0:C], g[2 * C:3 * C]]).reshape(1, C2)
    gb = jnp.concatenate([g[C:2 * C], g[3 * C:4 * C]]).reshape(1, C2)
    ba = jnp.concatenate([bt[0:C], bt[2 * C:3 * C]]).reshape(1, C2)
    bb = jnp.concatenate([bt[C:2 * C], bt[3 * C:4 * C]]).reshape(1, C2)
    wa = jnp.concatenate([w[0:C], w[2 * C:3 * C]], axis=0)       # (2C, Cout)
    wb = jnp.concatenate([w[C:2 * C], w[3 * C:4 * C]], axis=0)   # (2C, Cout)

    in_itm = x.dtype.itemsize
    out_itm = x.dtype.itemsize
    w_itm = wa.dtype.itemsize

    # Per-generation VMEM budget from physical capacity (128 MiB on v5e/v6e,
    # 64 MiB on v7x), with headroom for compiler scratch.
    vmem_budget = int(0.75 * _physical_vmem_bytes())

    # Fixed single-buffered parameter footprint + per-row streaming/temporaries
    # (a, b, ya, yb in f32, the two bf16 matmul operands, the f32 accumulator).
    param_bytes = 2 * C2 * Cout * w_itm + 4 * C2 * 4
    per_row = (2 * (2 * C2) * in_itm        # x tile, double-buffered
               + 2 * Cout * out_itm         # output tile, double-buffered
               + 4 * C2 * 4                 # a, b, ya, yb (f32)
               + 2 * C2 * w_itm             # bf16 matmul operands
               + Cout * 4)                  # f32 accumulator

    def fits(th):
        return param_bytes + th * W2 * per_row <= vmem_budget

    th = _pick_row_block(B * H2, W2, fits, min_big_rows=target_tile_rows)
    rows = th * W2
    grid = (B * H2 // th,)

    M = B * H2 * W2
    cost = pl.CostEstimate(
        flops=2 * M * C4 * Cout + 10 * M * C4,
        transcendentals=M,
        bytes_accessed=int(x6.size * in_itm + M * Cout * out_itm
                           + 2 * C2 * Cout * w_itm + 4 * C2 * 4),
    )

    # TODO(synk): optional few-% win when Cout is not a multiple of 128 (e.g. the
    # C=96 stage): pad Cout to the next multiple of 128 with zero weight columns
    # and slice the output afterwards so the stores stay lane-dense.
    out2d = pl.pallas_call(
        _patch_merge_kernel,
        out_shape=jax.ShapeDtypeStruct((M, Cout), x.dtype),
        grid_spec=pltpu.PrefetchScalarGridSpec(
            num_scalar_prefetch=0,
            grid=grid,
            in_specs=[
                # Single contiguous input stream per grid step.
                # TODO(synk): on v5e, sweep pipeline_mode=pl.Buffered(3) here for
                # the small-C stages (exposed DMA latency; VMEM is plentiful).
                pl.BlockSpec((th, 2, W2, C2), lambda i: (i, 0, 0, 0)),
                # Grid-invariant operands: single-buffered.
                pl.BlockSpec((1, C2), lambda i: (0, 0),
                             pipeline_mode=pl.Buffered(1)),           # gamma_a
                pl.BlockSpec((1, C2), lambda i: (0, 0),
                             pipeline_mode=pl.Buffered(1)),           # gamma_b
                pl.BlockSpec((1, C2), lambda i: (0, 0),
                             pipeline_mode=pl.Buffered(1)),           # beta_a
                pl.BlockSpec((1, C2), lambda i: (0, 0),
                             pipeline_mode=pl.Buffered(1)),           # beta_b
                pl.BlockSpec((C2, Cout), lambda i: (0, 0),
                             pipeline_mode=pl.Buffered(1)),           # w_a
                pl.BlockSpec((C2, Cout), lambda i: (0, 0),
                             pipeline_mode=pl.Buffered(1)),           # w_b
            ],
            out_specs=pl.BlockSpec((rows, Cout), lambda i: (i, 0)),
        ),
        compiler_params=pltpu.CompilerParams(
            dimension_semantics=("parallel",),
            vmem_limit_bytes=int(vmem_budget),
        ),
        cost_estimate=cost,
    )(x6, ga, gb, ba, bb, wa, wb)

    return out2d.reshape(B, H2 * W2, Cout)


def _reference(x, patch_res, gamma, beta, weight):
    B, L, C = x.shape
    H, W = patch_res
    xi = x.reshape(B, H, W, C)
    x1 = xi[:, 0::2, 0::2, :]
    x2 = xi[:, 1::2, 0::2, :]
    x3 = xi[:, 0::2, 1::2, :]
    x4 = xi[:, 1::2, 1::2, :]
    xm = jnp.concatenate([x1, x2, x3, x4], -1).reshape(B, -1, 4 * C)
    mean = jnp.mean(xm, axis=-1, keepdims=True)
    var = jnp.mean((xm - mean) ** 2, axis=-1, keepdims=True)
    xh = (xm - mean) * jax.lax.rsqrt(var + LN_EPS)
    y = xh * gamma + beta
    return y @ weight


if __name__ == "__main__":
    # Module config: input_patch_res=(16, 16), in_chans=4  ->  x: (2, 256, 4)
    B, H, W, C = 2, 16, 16, 4
    patch_res = (H, W)

    key = jax.random.PRNGKey(0)
    kx, kw, kg, kb = jax.random.split(key, 4)

    x = jax.random.normal(kx, (B, H * W, C), dtype=jnp.float32)
    # PyTorch nn.Linear(4C, 2C, bias=False).weight is (2C, 4C); we store W^T.
    weight = jax.random.normal(kw, (4 * C, 2 * C), dtype=jnp.float32) * 0.1
    gamma = 1.0 + 0.05 * jax.random.normal(kg, (4 * C,), dtype=jnp.float32)
    beta = 0.05 * jax.random.normal(kb, (4 * C,), dtype=jnp.float32)

    out = patch_merging(x, patch_res, gamma, beta, weight)
    out = jax.block_until_ready(out)

    ref = _reference(x, patch_res, gamma, beta, weight)
    assert out.shape == (B, (H // 2) * (W // 2), 2 * C)
    # bf16-in / f32-accumulate matmul vs. the pure-f32 reference -> loosened tolerance.
    assert jnp.allclose(out, ref, atol=2e-2, rtol=2e-2), float(jnp.max(jnp.abs(out - ref)))

    print("KERNEL_OK")
</pallas_src>

<mosaic_0001>
module attributes {stable_mosaic.version = 11 : i64} {
  func.func @_patch_merge_kernel(%arg0: i32, %arg1: memref<8x2x8x8xf32, #tpu.memory_space<vmem>>, %arg2: memref<1x8xf32, #tpu.memory_space<vmem>>, %arg3: memref<1x8xf32, #tpu.memory_space<vmem>>, %arg4: memref<1x8xf32, #tpu.memory_space<vmem>>, %arg5: memref<1x8xf32, #tpu.memory_space<vmem>>, %arg6: memref<8x8xbf16, #tpu.memory_space<vmem>>, %arg7: memref<8x8xbf16, #tpu.memory_space<vmem>>, %arg8: memref<64x8xf32, #tpu.memory_space<vmem>>) attributes {dimension_semantics = [#tpu.dimension_semantics<parallel>], iteration_bounds = array<i64: 2>, scalar_prefetch = 0 : i64, scratch_operands = 0 : i64, tpu.core_type = #tpu.core_type<tc>, window_params = [{transform_indices = @transform_0, window_bounds = array<i64: 8, 2, 8, 8>}, {pipeline_mode = #tpu.pipeline_mode<synchronous>, transform_indices = @transform_1, window_bounds = array<i64: 1, 8>}, {pipeline_mode = #tpu.pipeline_mode<synchronous>, transform_indices = @transform_2, window_bounds = array<i64: 1, 8>}, {pipeline_mode = #tpu.pipeline_mode<synchronous>, transform_indices = @transform_3, window_bounds = array<i64: 1, 8>}, {pipeline_mode = #tpu.pipeline_mode<synchronous>, transform_indices = @transform_4, window_bounds = array<i64: 1, 8>}, {pipeline_mode = #tpu.pipeline_mode<synchronous>, transform_indices = @transform_5, window_bounds = array<i64: 8, 8>}, {pipeline_mode = #tpu.pipeline_mode<synchronous>, transform_indices = @transform_6, window_bounds = array<i64: 8, 8>}, {transform_indices = @transform_7, window_bounds = array<i64: 64, 8>}]} {
    %c0 = arith.constant 0 : index
    %c0_0 = arith.constant 0 : index
    %c0_1 = arith.constant 0 : index
    %c0_2 = arith.constant 0 : index
    %0 = vector.load %arg1[%c0, %c0_0, %c0_1, %c0_2] : memref<8x2x8x8xf32, #tpu.memory_space<vmem>>, vector<8x2x8x8xf32>
    %1 = vector.extract_strided_slice %0 {offsets = [0, 0, 0, 0], sizes = [8, 1, 8, 8], strides = [1, 1, 1, 1]} : vector<8x2x8x8xf32> to vector<8x1x8x8xf32>
    %2 = vector.shape_cast %1 : vector<8x1x8x8xf32> to vector<8x8x8xf32>
    %3 = vector.extract_strided_slice %0 {offsets = [0, 1, 0, 0], sizes = [8, 1, 8, 8], strides = [1, 1, 1, 1]} : vector<8x2x8x8xf32> to vector<8x1x8x8xf32>
    %4 = vector.shape_cast %3 : vector<8x1x8x8xf32> to vector<8x8x8xf32>
    %cst = arith.constant dense<0.000000e+00> : vector<8x8xf32>
    %5 = vector.multi_reduction <add>, %2, %cst [2] : vector<8x8x8xf32> to vector<8x8xf32>
    %6 = vector.shape_cast %5 : vector<8x8xf32> to vector<8x8x1xf32>
    %cst_3 = arith.constant dense<0.000000e+00> : vector<8x8xf32>
    %7 = vector.multi_reduction <add>, %4, %cst_3 [2] : vector<8x8x8xf32> to vector<8x8xf32>
    %8 = vector.shape_cast %7 : vector<8x8xf32> to vector<8x8x1xf32>
    %9 = arith.addf %6, %8 : vector<8x8x1xf32>
    %10 = arith.mulf %2, %2 : vector<8x8x8xf32>
    %cst_4 = arith.constant dense<0.000000e+00> : vector<8x8xf32>
    %11 = vector.multi_reduction <add>, %10, %cst_4 [2] : vector<8x8x8xf32> to vector<8x8xf32>
    %12 = vector.shape_cast %11 : vector<8x8xf32> to vector<8x8x1xf32>
    %13 = arith.mulf %4, %4 : vector<8x8x8xf32>
    %cst_5 = arith.constant dense<0.000000e+00> : vector<8x8xf32>
    %14 = vector.multi_reduction <add>, %13, %cst_5 [2] : vector<8x8x8xf32> to vector<8x8xf32>
    %15 = vector.shape_cast %14 : vector<8x8xf32> to vector<8x8x1xf32>
    %16 = arith.addf %12, %15 : vector<8x8x1xf32>
    %cst_6 = arith.constant 6.250000e-02 : f32
    %17 = vector.broadcast %cst_6 : f32 to vector<8x8x1xf32>
    %18 = arith.mulf %9, %17 : vector<8x8x1xf32>
    %cst_7 = arith.constant 6.250000e-02 : f32
    %19 = vector.broadcast %cst_7 : f32 to vector<8x8x1xf32>
    %20 = arith.mulf %16, %19 : vector<8x8x1xf32>
    %21 = arith.mulf %18, %18 : vector<8x8x1xf32>
    %22 = arith.subf %20, %21 : vector<8x8x1xf32>
    %cst_8 = arith.constant 0.000000e+00 : f32
    %23 = vector.broadcast %cst_8 : f32 to vector<8x8x1xf32>
    %24 = arith.maximumf %22, %23 : vector<8x8x1xf32>
    %cst_9 = arith.constant 9.99999974E-6 : f32
    %25 = vector.broadcast %cst_9 : f32 to vector<8x8x1xf32>
    %26 = arith.addf %24, %25 : vector<8x8x1xf32>
    %27 = math.rsqrt %26 : vector<8x8x1xf32>
    %c0_10 = arith.constant 0 : index
    %c0_11 = arith.constant 0 : index
    %28 = vector.load %arg2[%c0_10, %c0_11] : memref<1x8xf32, #tpu.memory_space<vmem>>, vector<1x8xf32>
    %29 = vector.shape_cast %28 : vector<1x8xf32> to vector<1x1x8xf32>
    %c0_12 = arith.constant 0 : index
    %c0_13 = arith.constant 0 : index
    %30 = vector.load %arg3[%c0_12, %c0_13] : memref<1x8xf32, #tpu.memory_space<vmem>>, vector<1x8xf32>
    %31 = vector.shape_cast %30 : vector<1x8xf32> to vector<1x1x8xf32>
    %c0_14 = arith.constant 0 : index
    %c0_15 = arith.constant 0 : index
    %32 = vector.load %arg4[%c0_14, %c0_15] : memref<1x8xf32, #tpu.memory_space<vmem>>, vector<1x8xf32>
    %33 = vector.shape_cast %32 : vector<1x8xf32> to vector<1x1x8xf32>
    %c0_16 = arith.constant 0 : index
    %c0_17 = arith.constant 0 : index
    %34 = vector.load %arg5[%c0_16, %c0_17] : memref<1x8xf32, #tpu.memory_space<vmem>>, vector<1x8xf32>
    %35 = vector.shape_cast %34 : vector<1x8xf32> to vector<1x1x8xf32>
    %36 = vector.broadcast %18 : vector<8x8x1xf32> to vector<8x8x8xf32>
    %37 = arith.subf %2, %36 : vector<8x8x8xf32>
    %38 = vector.broadcast %27 : vector<8x8x1xf32> to vector<8x8x8xf32>
    %39 = arith.mulf %37, %38 : vector<8x8x8xf32>
    %40 = vector.broadcast %29 : vector<1x1x8xf32> to vector<8x8x8xf32>
    %41 = arith.mulf %39, %40 : vector<8x8x8xf32>
    %42 = vector.broadcast %33 : vector<1x1x8xf32> to vector<8x8x8xf32>
    %43 = arith.addf %41, %42 : vector<8x8x8xf32>
    %44 = vector.broadcast %18 : vector<8x8x1xf32> to vector<8x8x8xf32>
    %45 = arith.subf %4, %44 : vector<8x8x8xf32>
    %46 = vector.broadcast %27 : vector<8x8x1xf32> to vector<8x8x8xf32>
    %47 = arith.mulf %45, %46 : vector<8x8x8xf32>
    %48 = vector.broadcast %31 : vector<1x1x8xf32> to vector<8x8x8xf32>
    %49 = arith.mulf %47, %48 : vector<8x8x8xf32>
    %50 = vector.broadcast %35 : vector<1x1x8xf32> to vector<8x8x8xf32>
    %51 = arith.addf %49, %50 : vector<8x8x8xf32>
    %52 = arith.truncf %43 : vector<8x8x8xf32> to vector<8x8x8xbf16>
    %53 = vector.shape_cast %52 : vector<8x8x8xbf16> to vector<64x8xbf16>
    %54 = arith.truncf %51 : vector<8x8x8xf32> to vector<8x8x8xbf16>
    %55 = vector.shape_cast %54 : vector<8x8x8xbf16> to vector<64x8xbf16>
    %c0_18 = arith.constant 0 : index
    %c0_19 = arith.constant 0 : index
    %56 = vector.load %arg6[%c0_18, %c0_19] : memref<8x8xbf16, #tpu.memory_space<vmem>>, vector<8x8xbf16>
    %cst_20 = arith.constant dense<0.000000e+00> : vector<64x8xf32>
    %57 = tpu.matmul %53, %56, %cst_20 {dimension_numbers = #tpu.dot_dimension_numbers<[1], [0], [0], [1], [0, 0, 1, 1], [], []>} : vector<64x8xbf16>, vector<8x8xbf16>, vector<64x8xf32> -> vector<64x8xf32>
    %c0_21 = arith.constant 0 : index
    %c0_22 = arith.constant 0 : index
    %58 = vector.load %arg7[%c0_21, %c0_22] : memref<8x8xbf16, #tpu.memory_space<vmem>>, vector<8x8xbf16>
    %cst_23 = arith.constant dense<0.000000e+00> : vector<64x8xf32>
    %59 = tpu.matmul %55, %58, %cst_23 {dimension_numbers = #tpu.dot_dimension_numbers<[1], [0], [0], [1], [0, 0, 1, 1], [], []>} : vector<64x8xbf16>, vector<8x8xbf16>, vector<64x8xf32> -> vector<64x8xf32>
    %60 = arith.addf %57, %59 : vector<64x8xf32>
    %c0_24 = arith.constant 0 : index
    %c0_25 = arith.constant 0 : index
    %61 = vector.load %arg8[%c0_24, %c0_25] : memref<64x8xf32, #tpu.memory_space<vmem>>, vector<64x8xf32>
    tpu.vector_store %arg8[%c0_24, %c0_25], %60 {strides = array<i32>} : memref<64x8xf32, #tpu.memory_space<vmem>>, vector<64x8xf32>,
    return
  }
  func.func @transform_0(%arg0: i32) -> (i32, i32, i32, i32) {
    %c0_i32 = arith.constant 0 : i32
    %c0_i32_0 = arith.constant 0 : i32
    %c0_i32_1 = arith.constant 0 : i32
    %c0_i32_2 = arith.constant 0 : i32
    return %arg0, %c0_i32, %c0_i32_0, %c0_i32_1 : i32, i32, i32, i32
  }
  func.func @transform_1(%arg0: i32) -> (i32, i32) {
    %c0_i32 = arith.constant 0 : i32
    %c0_i32_0 = arith.constant 0 : i32
    %c0_i32_1 = arith.constant 0 : i32
    return %c0_i32, %c0_i32_0 : i32, i32
  }
  func.func @transform_2(%arg0: i32) -> (i32, i32) {
    %c0_i32 = arith.constant 0 : i32
    %c0_i32_0 = arith.constant 0 : i32
    %c0_i32_1 = arith.constant 0 : i32
    return %c0_i32, %c0_i32_0 : i32, i32
  }
  func.func @transform_3(%arg0: i32) -> (i32, i32) {
    %c0_i32 = arith.constant 0 : i32
    %c0_i32_0 = arith.constant 0 : i32
    %c0_i32_1 = arith.constant 0 : i32
    return %c0_i32, %c0_i32_0 : i32, i32
  }
  func.func @transform_4(%arg0: i32) -> (i32, i32) {
    %c0_i32 = arith.constant 0 : i32
    %c0_i32_0 = arith.constant 0 : i32
    %c0_i32_1 = arith.constant 0 : i32
    return %c0_i32, %c0_i32_0 : i32, i32
  }
  func.func @transform_5(%arg0: i32) -> (i32, i32) {
    %c0_i32 = arith.constant 0 : i32
    %c0_i32_0 = arith.constant 0 : i32
    %c0_i32_1 = arith.constant 0 : i32
    return %c0_i32, %c0_i32_0 : i32, i32
  }
  func.func @transform_6(%arg0: i32) -> (i32, i32) {
    %c0_i32 = arith.constant 0 : i32
    %c0_i32_0 = arith.constant 0 : i32
    %c0_i32_1 = arith.constant 0 : i32
    return %c0_i32, %c0_i32_0 : i32, i32
  }
  func.func @transform_7(%arg0: i32) -> (i32, i32) {
    %c0_i32 = arith.constant 0 : i32
    %c0_i32_0 = arith.constant 0 : i32
    return %arg0, %c0_i32 : i32, i32
  }
}

</mosaic_0001>

<llo_original>
// kernel: tpu_custom_call.1
$region0: #{tpu_custom_call.1}
  #allocation0 [shape = 'u32[]', space=smem, size = 0x4, offset = 0x4, fixed_abs, tag = 'smem constant byte address 0x4 - core index']
  #allocation1 [shape = 'u32[144,128]{1,0:T(1,128)}', space=vmem, size = 0x12000, scoped, tag = 'internal scratch']
  %s0 = inlined_call_operand.vmem [shape: f32[16,2,8,8], index: 0, kind: input, shape index: {}]
  %s1 = inlined_call_operand.vmem [shape: f32[1,8], index: 1, kind: input, shape index: {}]
  %s2 = inlined_call_operand.vmem [shape: f32[1,8], index: 2, kind: input, shape index: {}]
  %s3 = inlined_call_operand.vmem [shape: f32[1,8], index: 3, kind: input, shape index: {}]
  %s4 = inlined_call_operand.vmem [shape: f32[1,8], index: 4, kind: input, shape index: {}]
  %s5 = inlined_call_operand.vmem [shape: bf16[8,8], index: 5, kind: input, shape index: {}]
  %s6 = inlined_call_operand.vmem [shape: bf16[8,8], index: 6, kind: input, shape index: {}]
  %s7 = inlined_call_operand.vmem [shape: f32[128,8], index: 7, kind: output, shape index: {}]
  %s8 = sld [smem:[#allocation0]]
  $region61: #{tpu_custom_call.1} parent=0
    _
  %s10 = ssub.s32 1, %s8
  %s11 = scalar_select 0, %s10, %s8
  loop: start=0, step=1, limit=4
  $region2: #{tpu_custom_call.1} parent=0 // loop_pre_header
    _
  $region3: #{tpu_custom_call.1} parent=0 // loop_header
    %s13 = sphi 0, %s17
    %p14 = scmp.ge.s32.totalorder %s13, 4
    %s23 = sphi 0, %s25
    %s26 = sphi 0, %s23
    %s27 = sphi 0, %s26
    %s43 = sphi 0, %s27
    %s47 = sphi 0, %s47
    %s49 = sphi 0, %s47
    %s50 = sphi 0, %s49
    %s64 = sphi 0, %s50
    %s68 = sphi 0, %s68
    %s70 = sphi 0, %s68
    %s71 = sphi 0, %s70
    %s85 = sphi 0, %s71
    %s89 = sphi 0, %s89
    %s91 = sphi 0, %s89
    %s92 = sphi 0, %s91
    %s106 = sphi 0, %s92
    %s110 = sphi 0, %s110
    %s112 = sphi 0, %s110
    %s113 = sphi 0, %s112
    %s127 = sphi 0, %s113
    %s131 = sphi 0, %s131
    %s133 = sphi 0, %s131
    %s134 = sphi 0, %s133
    %s148 = sphi 0, %s134
    %s152 = sphi 0, %s152
    %s154 = sphi 0, %s152
    %s155 = sphi 0, %s154
    %s169 = sphi 0, %s155
    %s175 = sphi 0, %s177
    %s178 = sphi 0, %s175
    %s179 = sphi 0, %s178
    %s195 = sphi 0, %s179
  $region4: #{tpu_custom_call.1} parent=0 // loop_header_branch
    %16 = sbr.rel (%p14) target = $region8
  $region5: #{tpu_custom_call.1} parent=0 // loop_body
    %s18 = ssub.s32 %s13, 1
    %s19 = ssub.s32 %s13, 2
    %s20 = sadd.s32 %s13, 1
    %s21 = ssub.s32 %s13, %s20
    %p22 = scmp.eq.s32.totalorder %s21, 0
    %s24 = sadd.s32 %s23, 1
    %s25 = scalar_select %p22, %s23, %s24
    %p28 = pneg %p22
    %p29 = scmp.eq.s32.totalorder %s13, 1
    %p30 = por %p28, %p29
    %p31 = scmp.ne.s32.totalorder %s23, %s26
    %p32 = scmp.eq.s32.totalorder %s13, 0
    %p33 = por %p31, %p32
    %p34 = scmp.ne.s32.totalorder %s23, %s26
    %p35 = scmp.eq.s32.totalorder %s18, 1
    %p36 = por %p34, %p35
    %p37 = scmp.ne.s32.totalorder %s26, %s27
    %p38 = scmp.eq.s32.totalorder %s18, 0
    %p39 = por %p37, %p38
    %p40 = scmp.ne.s32.totalorder %s26, %s27
    %p41 = scmp.eq.s32.totalorder %s19, 1
    %p42 = por %p40, %p41
    %p44 = scmp.ne.s32.totalorder %s27, %s43
    %p45 = scmp.eq.s32.totalorder %s19, 0
    %p46 = por %p44, %p45
    %s48 = sadd.s32 %s47, 1
    %p51 = scmp.eq.s32.totalorder %s13, 1
    %p52 = scmp.ne.s32.totalorder %s47, %s49
    %p53 = scmp.eq.s32.totalorder %s13, 0
    %p54 = por %p52, %p53
    %p55 = scmp.ne.s32.totalorder %s47, %s49
    %p56 = scmp.eq.s32.totalorder %s18, 1
    %p57 = por %p55, %p56
    %p58 = scmp.ne.s32.totalorder %s49, %s50
    %p59 = scmp.eq.s32.totalorder %s18, 0
    %p60 = por %p58, %p59
    %p61 = scmp.ne.s32.totalorder %s49, %s50
    %p62 = scmp.eq.s32.totalorder %s19, 1
    %p63 = por %p61, %p62
    %p65 = scmp.ne.s32.totalorder %s50, %s64
    %p66 = scmp.eq.s32.totalorder %s19, 0
    %p67 = por %p65, %p66
    %s69 = sadd.s32 %s68, 1
    %p72 = scmp.eq.s32.totalorder %s13, 1
    %p73 = scmp.ne.s32.totalorder %s68, %s70
    %p74 = scmp.eq.s32.totalorder %s13, 0
    %p75 = por %p73, %p74
    %p76 = scmp.ne.s32.totalorder %s68, %s70
    %p77 = scmp.eq.s32.totalorder %s18, 1
    %p78 = por %p76, %p77
    %p79 = scmp.ne.s32.totalorder %s70, %s71
    %p80 = scmp.eq.s32.totalorder %s18, 0
    %p81 = por %p79, %p80
    %p82 = scmp.ne.s32.totalorder %s70, %s71
    %p83 = scmp.eq.s32.totalorder %s19, 1
    %p84 = por %p82, %p83
    %p86 = scmp.ne.s32.totalorder %s71, %s85
    %p87 = scmp.eq.s32.totalorder %s19, 0
    %p88 = por %p86, %p87
    %s90 = sadd.s32 %s89, 1
    %p93 = scmp.eq.s32.totalorder %s13, 1
    %p94 = scmp.ne.s32.totalorder %s89, %s91
    %p95 = scmp.eq.s32.totalorder %s13, 0
    %p96 = por %p94, %p95
    %p97 = scmp.ne.s32.totalorder %s89, %s91
    %p98 = scmp.eq.s32.totalorder %s18, 1
    %p99 = por %p97, %p98
    %p100 = scmp.ne.s32.totalorder %s91, %s92
    %p101 = scmp.eq.s32.totalorder %s18, 0
    %p102 = por %p100, %p101
    %p103 = scmp.ne.s32.totalorder %s91, %s92
    %p104 = scmp.eq.s32.totalorder %s19, 1
    %p105 = por %p103, %p104
    %p107 = scmp.ne.s32.totalorder %s92, %s106
    %p108 = scmp.eq.s32.totalorder %s19, 0
    %p109 = por %p107, %p108
    %s111 = sadd.s32 %s110, 1
    %p114 = scmp.eq.s32.totalorder %s13, 1
    %p115 = scmp.ne.s32.totalorder %s110, %s112
    %p116 = scmp.eq.s32.totalorder %s13, 0
    %p117 = por %p115, %p116
    %p118 = scmp.ne.s32.totalorder %s110, %s112
    %p119 = scmp.eq.s32.totalorder %s18, 1
    %p120 = por %p118, %p119
    %p121 = scmp.ne.s32.totalorder %s112, %s113
    %p122 = scmp.eq.s32.totalorder %s18, 0
    %p123 = por %p121, %p122
    %p124 = scmp.ne.s32.totalorder %s112, %s113
    %p125 = scmp.eq.s32.totalorder %s19, 1
    %p126 = por %p124, %p125
    %p128 = scmp.ne.s32.totalorder %s113, %s127
    %p129 = scmp.eq.s32.totalorder %s19, 0
    %p130 = por %p128, %p129
    %s132 = sadd.s32 %s131, 1
    %p135 = scmp.eq.s32.totalorder %s13, 1
    %p136 = scmp.ne.s32.totalorder %s131, %s133
    %p137 = scmp.eq.s32.totalorder %s13, 0
    %p138 = por %p136, %p137
    %p139 = scmp.ne.s32.totalorder %s131, %s133
    %p140 = scmp.eq.s32.totalorder %s18, 1
    %p141 = por %p139, %p140
    %p142 = scmp.ne.s32.totalorder %s133, %s134
    %p143 = scmp.eq.s32.totalorder %s18, 0
    %p144 = por %p142, %p143
    %p145 = scmp.ne.s32.totalorder %s133, %s134
    %p146 = scmp.eq.s32.totalorder %s19, 1
    %p147 = por %p145, %p146
    %p149 = scmp.ne.s32.totalorder %s134, %s148
    %p150 = scmp.eq.s32.totalorder %s19, 0
    %p151 = por %p149, %p150
    %s153 = sadd.s32 %s152, 1
    %p156 = scmp.eq.s32.totalorder %s13, 1
    %p157 = scmp.ne.s32.totalorder %s152, %s154
    %p158 = scmp.eq.s32.totalorder %s13, 0
    %p159 = por %p157, %p158
    %p160 = scmp.ne.s32.totalorder %s152, %s154
    %p161 = scmp.eq.s32.totalorder %s18, 1
    %p162 = por %p160, %p161
    %p163 = scmp.ne.s32.totalorder %s154, %s155
    %p164 = scmp.eq.s32.totalorder %s18, 0
    %p165 = por %p163, %p164
    %p166 = scmp.ne.s32.totalorder %s154, %s155
    %p167 = scmp.eq.s32.totalorder %s19, 1
    %p168 = por %p166, %p167
    %p170 = scmp.ne.s32.totalorder %s155, %s169
    %p171 = scmp.eq.s32.totalorder %s19, 0
    %p172 = por %p170, %p171
    %s173 = ssub.s32 %s13, %s20
    %p174 = scmp.eq.s32.totalorder %s173, 0
    %s176 = sadd.s32 %s175, 1
    %s177 = scalar_select %p174, %s175, %s176
    %p180 = pneg %p174
    %p181 = scmp.eq.s32.totalorder %s13, 1
    %p182 = por %p180, %p181
    %p183 = scmp.ne.s32.totalorder %s175, %s178
    %p184 = scmp.eq.s32.totalorder %s13, 0
    %p185 = por %p183, %p184
    %p186 = scmp.ne.s32.totalorder %s175, %s178
    %p187 = scmp.eq.s32.totalorder %s18, 1
    %p188 = por %p186, %p187
    %p189 = scmp.ne.s32.totalorder %s178, %s179
    %p190 = scmp.eq.s32.totalorder %s18, 0
    %p191 = por %p189, %p190
    %p192 = scmp.ne.s32.totalorder %s178, %s179
    %p193 = scmp.eq.s32.totalorder %s19, 1
    %p194 = por %p192, %p193
    %p196 = scmp.ne.s32.totalorder %s179, %s195
    %p197 = scmp.eq.s32.totalorder %s19, 0
    %p198 = por %p196, %p197
    %p199 = scmp.le.s32.totalorder 1, %s13
    %p200 = scmp.lt.s32.totalorder %s13, 3
    %p201 = pnand %p199, %p200
    %p202 = pneg %p201
    // Predicated region
    $region9: #{tpu_custom_call.1} parent=5 // pred_check
      _
    $region10: #{tpu_custom_call.1} parent=5 // pred_check_branch
      %204 = sbr.rel (%p201) target = $region12
    $region11: #{tpu_custom_call.1} parent=5 // pred_region
      %s205 = ssub.s32 %s13, 1
      // Predicated region
      $region13: #{tpu_custom_call.1} parent=11 // pred_check
        %p206 = pneg %p60
      $region14: #{tpu_custom_call.1} parent=11 // pred_check_branch
        %208 = sbr.rel (%p206) target = $region16
      $region15: #{tpu_custom_call.1} parent=11 // pred_region
        _
      $region16: #{tpu_custom_call.1} parent=11 // pred_fallthru
        _
      // Predicated region
      $region17: #{tpu_custom_call.1} parent=11 // pred_check
        %p209 = pneg %p81
      $region18: #{tpu_custom_call.1} parent=11 // pred_check_branch
        %211 = sbr.rel (%p209) target = $region20
      $region19: #{tpu_custom_call.1} parent=11 // pred_region
        _
      $region20: #{tpu_custom_call.1} parent=11 // pred_fallthru
        _
      // Predicated region
      $region21: #{tpu_custom_call.1} parent=11 // pred_check
        %p212 = pneg %p102
      $region22: #{tpu_custom_call.1} parent=11 // pred_check_branch
        %214 = sbr.rel (%p212) target = $region24
      $region23: #{tpu_custom_call.1} parent=11 // pred_region
        _
      $region24: #{tpu_custom_call.1} parent=11 // pred_fallthru
        _
      // Predicated region
      $region25: #{tpu_custom_call.1} parent=11 // pred_check
        %p215 = pneg %p123
      $region26: #{tpu_custom_call.1} parent=11 // pred_check_branch
        %217 = sbr.rel (%p215) target = $region28
      $region27: #{tpu_custom_call.1} parent=11 // pred_region
        _
      $region28: #{tpu_custom_call.1} parent=11 // pred_fallthru
        _
      // Predicated region
      $region29: #{tpu_custom_call.1} parent=11 // pred_check
        %p218 = pneg %p144
      $region30: #{tpu_custom_call.1} parent=11 // pred_check_branch
        %220 = sbr.rel (%p218) target = $region32
      $region31: #{tpu_custom_call.1} parent=11 // pred_region
        _
      $region32: #{tpu_custom_call.1} parent=11 // pred_fallthru
        _
      // Predicated region
      $region33: #{tpu_custom_call.1} parent=11 // pred_check
        %p221 = pneg %p165
      $region34: #{tpu_custom_call.1} parent=11 // pred_check_branch
        %223 = sbr.rel (%p221) target = $region36
      $region35: #{tpu_custom_call.1} parent=11 // pred_region
        _
      $region36: #{tpu_custom_call.1} parent=11 // pred_fallthru
        _
    $region12: #{tpu_custom_call.1} parent=5 // pred_fallthru
      _
    %p224 = scmp.lt.s32.totalorder %s13, 2
    // Predicated region
    $region37: #{tpu_custom_call.1} parent=5 // pred_check
      %p225 = pneg %p224
    $region38: #{tpu_custom_call.1} parent=5 // pred_check_branch
      %227 = sbr.rel (%p225) target = $region40
    $region39: #{tpu_custom_call.1} parent=5 // pred_region
      // Predicated region
      $region41: #{tpu_custom_call.1} parent=39 // pred_check
        %p228 = pneg %p33
      $region42: #{tpu_custom_call.1} parent=39 // pred_check_branch
        %230 = sbr.rel (%p228) target = $region44
      $region43: #{tpu_custom_call.1} parent=39 // pred_region
        %s231 = smul.u32 8, %s13
        %p232 = scmp.lt.s32.totalorder %s231, 15
        %s233 = scalar_select %p232, %s231, 15
        %s234 = smul.addr %s233, 2
        %s235 = smul.addr %s234, 8
        %s236 = scalar_lea.vmem %s0, %s235
        %s237 = smul.u32 8, %s13
      $region44: #{tpu_custom_call.1} parent=39 // pred_fallthru
        _
    $region40: #{tpu_custom_call.1} parent=5 // pred_fallthru
      _
    %p238 = scmp.le.s32.totalorder 1, %s13
    %p239 = scmp.lt.s32.totalorder %s13, 3
    %p240 = pnand %p238, %p239
    %p241 = pneg %p240
    // Predicated region
    $region45: #{tpu_custom_call.1} parent=5 // pred_check
      _
    $region46: #{tpu_custom_call.1} parent=5 // pred_check_branch
      %243 = sbr.rel (%p240) target = $region48
    $region47: #{tpu_custom_call.1} parent=5 // pred_region
      %s244 = ssub.s32 %s13, 1
      %s245 = smul.u32 8, %s18
      %p246 = scmp.lt.s32.totalorder %s245, 15
      %s247 = scalar_select %p246, %s245, 15
      %s248 = smul.addr %s247, 2
      %s249 = smul.addr %s248, 8
      %s250 = scalar_lea.vmem %s0, %s249
      %p251 = pneg %p39
      %p252 = pneg %p36
      %p253 = pneg %p60
      %p254 = pneg %p57
      %p255 = pneg %p81
      %p256 = pneg %p78
      %p257 = pneg %p102
      %p258 = pneg %p99
      %p259 = pneg %p123
      %p260 = pneg %p120
      %p261 = pneg %p144
      %p262 = pneg %p141
      %p263 = pneg %p165
      %p264 = pneg %p162
      %p265 = pneg %p191
      %p266 = pneg %p188
      %s267 = smul.u32 8, %s18
      %p268 = scmp.lt.s32.totalorder %s267, 15
      %s269 = scalar_select %p268, %s267, 15
      %s270 = smul.addr %s269, 8
      %s271 = scalar_lea.vmem %s7, %s270
      %s272 = smul.u32 8, %s18
      %p273 = scmp.lt.s32.totalorder %s272, 15
      %s274 = scalar_select %p273, %s272, 15
      %s275 = smul.addr %s274, 2
      %s276 = smul.addr %s275, 8
      %s277 = scalar_lea.vmem %s0, %s276
      %s278 = smul.u32 8, %s18
      %s279 = smul.u32 8, %s18
      %p280 = scmp.lt.s32.totalorder %s279, 15
      %s281 = scalar_select %p280, %s279, 15
      %s282 = smul.addr %s281, 8
      %s283 = scalar_lea.vmem %s7, %s282
      %s284 = smul.u32 8, %s18
      %v286 = vld [vmem:[%s277] sm:$0xff]
      %v287 = vld [vmem:[%s277 + $0x8] sm:$0xff]
      %v288 = vld [vmem:[%s277 + $0x10] sm:$0xff]
      %v289 = vld [vmem:[%s277 + $0x18] sm:$0xff]
      %v290 = vld [vmem:[%s277 + $0x20] sm:$0xff]
      %v291 = vld [vmem:[%s277 + $0x28] sm:$0xff]
      %v292 = vld [vmem:[%s277 + $0x30] sm:$0xff]
      %v293 = vld [vmem:[%s277 + $0x38] sm:$0xff]
      %v294 = vld [vmem:[%s277 + $0x40] sm:$0xff]
      %v295 = vld [vmem:[%s277 + $0x48] sm:$0xff]
      %v296 = vld [vmem:[%s277 + $0x50] sm:$0xff]
      %v297 = vld [vmem:[%s277 + $0x58] sm:$0xff]
      %v298 = vld [vmem:[%s277 + $0x60] sm:$0xff]
      %v299 = vld [vmem:[%s277 + $0x68] sm:$0xff]
      %v300 = vld [vmem:[%s277 + $0x70] sm:$0xff]
      %v301 = vld [vmem:[%s277 + $0x78] sm:$0xff]
      %vm302 = vcmask 64512
      %v303 = vsel %vm302, %v286, 0.0
      %304 = vadd.xlane.f32.xlu0 %v303
      %v305 = vpop.xlane.xlu0 %304
      %v306 = vsel %vm302, %v288, 0.0
      %307 = vadd.xlane.f32.xlu0 %v306
      %v308 = vpop.xlane.xlu0 %307
      %v309 = vsel %vm302, %v290, 0.0
      %310 = vadd.xlane.f32.xlu0 %v309
      %v311 = vpop.xlane.xlu0 %310
      %v312 = vsel %vm302, %v292, 0.0
      %313 = vadd.xlane.f32.xlu0 %v312
      %v314 = vpop.xlane.xlu0 %313
      %v315 = vsel %vm302, %v294, 0.0
      %316 = vadd.xlane.f32.xlu0 %v315
      %v317 = vpop.xlane.xlu0 %316
      %v318 = vsel %vm302, %v296, 0.0
      %319 = vadd.xlane.f32.xlu0 %v318
      %v320 = vpop.xlane.xlu0 %319
      %v321 = vsel %vm302, %v298, 0.0
      %322 = vadd.xlane.f32.xlu0 %v321
      %v323 = vpop.xlane.xlu0 %322
      %v324 = vsel %vm302, %v300, 0.0
      %325 = vadd.xlane.f32.xlu0 %v324
      %v326 = vpop.xlane.xlu0 %325
      %v327 = vsel %vm302, %v287, 0.0
      %328 = vadd.xlane.f32.xlu0 %v327
      %v329 = vpop.xlane.xlu0 %328
      %v330 = vsel %vm302, %v289, 0.0
      %331 = vadd.xlane.f32.xlu0 %v330
      %v332 = vpop.xlane.xlu0 %331
      %v333 = vsel %vm302, %v291, 0.0
      %334 = vadd.xlane.f32.xlu0 %v333
      %v335 = vpop.xlane.xlu0 %334
      %v336 = vsel %vm302, %v293, 0.0
      %337 = vadd.xlane.f32.xlu0 %v336
      %v338 = vpop.xlane.xlu0 %337
      %v339 = vsel %vm302, %v295, 0.0
      %340 = vadd.xlane.f32.xlu0 %v339
      %v341 = vpop.xlane.xlu0 %340
      %v342 = vsel %vm302, %v297, 0.0
      %343 = vadd.xlane.f32.xlu0 %v342
      %v344 = vpop.xlane.xlu0 %343
      %v345 = vsel %vm302, %v299, 0.0
      %346 = vadd.xlane.f32.xlu0 %v345
      %v347 = vpop.xlane.xlu0 %346
      %v348 = vsel %vm302, %v301, 0.0
      %349 = vadd.xlane.f32.xlu0 %v348
      %v350 = vpop.xlane.xlu0 %349
      %v351 = vadd.f32 %v305, %v329
      %v352 = vadd.f32 %v308, %v332
      %v353 = vadd.f32 %v311, %v335
      %v354 = vadd.f32 %v314, %v338
      %v355 = vadd.f32 %v317, %v341
      %v356 = vadd.f32 %v320, %v344
      %v357 = vadd.f32 %v323, %v347
      %v358 = vadd.f32 %v326, %v350
      %v359 = vmul.f32 %v286, %v286
      %v360 = vmul.f32 %v288, %v288
      %v361 = vmul.f32 %v290, %v290
      %v362 = vmul.f32 %v292, %v292
      %v363 = vmul.f32 %v294, %v294
      %v364 = vmul.f32 %v296, %v296
      %v365 = vmul.f32 %v298, %v298
      %v366 = vmul.f32 %v300, %v300
      %v367 = vsel %vm302, %v359, 0.0
      %368 = vadd.xlane.f32.xlu0 %v367
      %v369 = vpop.xlane.xlu0 %368
      %v370 = vsel %vm302, %v360, 0.0
      %371 = vadd.xlane.f32.xlu0 %v370
      %v372 = vpop.xlane.xlu0 %371
      %v373 = vsel %vm302, %v361, 0.0
      %374 = vadd.xlane.f32.xlu0 %v373
      %v375 = vpop.xlane.xlu0 %374
      %v376 = vsel %vm302, %v362, 0.0
      %377 = vadd.xlane.f32.xlu0 %v376
      %v378 = vpop.xlane.xlu0 %377
      %v379 = vsel %vm302, %v363, 0.0
      %380 = vadd.xlane.f32.xlu0 %v379
      %v381 = vpop.xlane.xlu0 %380
      %v382 = vsel %vm302, %v364, 0.0
      %383 = vadd.xlane.f32.xlu0 %v382
      %v384 = vpop.xlane.xlu0 %383
      %v385 = vsel %vm302, %v365, 0.0
      %386 = vadd.xlane.f32.xlu0 %v385
      %v387 = vpop.xlane.xlu0 %386
      %v388 = vsel %vm302, %v366, 0.0
      %389 = vadd.xlane.f32.xlu0 %v388
      %v390 = vpop.xlane.xlu0 %389
      %v391 = vmul.f32 %v287, %v287
      %v392 = vmul.f32 %v289, %v289
      %v393 = vmul.f32 %v291, %v291
      %v394 = vmul.f32 %v293, %v293
      %v395 = vmul.f32 %v295, %v295
      %v396 = vmul.f32 %v297, %v297
      %v397 = vmul.f32 %v299, %v299
      %v398 = vmul.f32 %v301, %v301
      %v399 = vsel %vm302, %v391, 0.0
      %400 = vadd.xlane.f32.xlu0 %v399
      %v401 = vpop.xlane.xlu0 %400
      %v402 = vsel %vm302, %v392, 0.0
      %403 = vadd.xlane.f32.xlu0 %v402
      %v404 = vpop.xlane.xlu0 %403
      %v405 = vsel %vm302, %v393, 0.0
      %406 = vadd.xlane.f32.xlu0 %v405
      %v407 = vpop.xlane.xlu0 %406
      %v408 = vsel %vm302, %v394, 0.0
      %409 = vadd.xlane.f32.xlu0 %v408
      %v410 = vpop.xlane.xlu0 %409
      %v411 = vsel %vm302, %v395, 0.0
      %412 = vadd.xlane.f32.xlu0 %v411
      %v413 = vpop.xlane.xlu0 %412
      %v414 = vsel %vm302, %v396, 0.0
      %415 = vadd.xlane.f32.xlu0 %v414
      %v416 = vpop.xlane.xlu0 %415
      %v417 = vsel %vm302, %v397, 0.0
      %418 = vadd.xlane.f32.xlu0 %v417
      %v419 = vpop.xlane.xlu0 %418
      %v420 = vsel %vm302, %v398, 0.0
      %421 = vadd.xlane.f32.xlu0 %v420
      %v422 = vpop.xlane.xlu0 %421
      %v423 = vadd.f32 %v369, %v401
      %v424 = vadd.f32 %v372, %v404
      %v425 = vadd.f32 %v375, %v407
      %v426 = vadd.f32 %v378, %v410
      %v427 = vadd.f32 %v381, %v413
      %v428 = vadd.f32 %v384, %v416
      %v429 = vadd.f32 %v387, %v419
      %v430 = vadd.f32 %v390, %v422
      %v431 = vmul.f32 %v351, 0.0625
      %v432 = vmul.f32 %v352, 0.0625
      %v433 = vmul.f32 %v353, 0.0625
      %v434 = vmul.f32 %v354, 0.0625
      %v435 = vmul.f32 %v355, 0.0625
      %v436 = vmul.f32 %v356, 0.0625
      %v437 = vmul.f32 %v357, 0.0625
      %v438 = vmul.f32 %v358, 0.0625
      %v439 = vmul.f32 %v423, 0.0625
      %v440 = vmul.f32 %v424, 0.0625
      %v441 = vmul.f32 %v425, 0.0625
      %v442 = vmul.f32 %v426, 0.0625
      %v443 = vmul.f32 %v427, 0.0625
      %v444 = vmul.f32 %v428, 0.0625
      %v445 = vmul.f32 %v429, 0.0625
      %v446 = vmul.f32 %v430, 0.0625
      %v447 = vmul.f32 %v431, %v431
      %v448 = vmul.f32 %v432, %v432
      %v449 = vmul.f32 %v433, %v433
      %v450 = vmul.f32 %v434, %v434
      %v451 = vmul.f32 %v435, %v435
      %v452 = vmul.f32 %v436, %v436
      %v453 = vmul.f32 %v437, %v437
      %v454 = vmul.f32 %v438, %v438
      %v455 = vsub.f32 %v439, %v447
      %v456 = vsub.f32 %v440, %v448
      %v457 = vsub.f32 %v441, %v449
      %v458 = vsub.f32 %v442, %v450
      %v459 = vsub.f32 %v443, %v451
      %v460 = vsub.f32 %v444, %v452
      %v461 = vsub.f32 %v445, %v453
      %v462 = vsub.f32 %v446, %v454
      %v463 = vmax.f32 %v455, 0.0
      %v464 = vmax.f32 %v456, 0.0
      %v465 = vmax.f32 %v457, 0.0
      %v466 = vmax.f32 %v458, 0.0
      %v467 = vmax.f32 %v459, 0.0
      %v468 = vmax.f32 %v460, 0.0
      %v469 = vmax.f32 %v461, 0.0
      %v470 = vmax.f32 %v462, 0.0
      %v471 = vadd.f32 %v463, 1e-05
      %v472 = vadd.f32 %v464, 1e-05
      %v473 = vadd.f32 %v465, 1e-05
      %v474 = vadd.f32 %v466, 1e-05
      %v475 = vadd.f32 %v467, 1e-05
      %v476 = vadd.f32 %v468, 1e-05
      %v477 = vadd.f32 %v469, 1e-05
      %v478 = vadd.f32 %v470, 1e-05
      %v479 = vrsqrt.pop %v471
      %v480 = vrsqrt.pop %v472
      %v481 = vrsqrt.pop %v473
      %v482 = vrsqrt.pop %v474
      %v483 = vrsqrt.pop %v475
      %v484 = vrsqrt.pop %v476
      %v485 = vrsqrt.pop %v477
      %v486 = vrsqrt.pop %v478
      %v487 = vld [vmem:[%s1] sm:$0x1]
      %v488 = vld [vmem:[%s2] sm:$0x1]
      %v489 = vld [vmem:[%s3] sm:$0x1]
      %v490 = vld [vmem:[%s4] sm:$0x1]
      %v491 = vsub.f32 %v286, %v431
      %v492 = vsub.f32 %v288, %v432
      %v493 = vsub.f32 %v290, %v433
      %v494 = vsub.f32 %v292, %v434
      %v495 = vsub.f32 %v294, %v435
      %v496 = vsub.f32 %v296, %v436
      %v497 = vsub.f32 %v298, %v437
      %v498 = vsub.f32 %v300, %v438
      %v499 = vmul.f32 %v491, %v479
      %v500 = vmul.f32 %v492, %v480
      %v501 = vmul.f32 %v493, %v481
      %v502 = vmul.f32 %v494, %v482
      %v503 = vmul.f32 %v495, %v483
      %v504 = vmul.f32 %v496, %v484
      %v505 = vmul.f32 %v497, %v485
      %v506 = vmul.f32 %v498, %v486
      %v508 = vlaneseq
      %v509 = vshrl.u32 %v508, 7
      %v510 = vsub.s32 0, %v509
      %v511 = vrot.slane %v487, %v510
      %v513 = vmul.f32 %v499, %v511
      %v514 = vmul.f32 %v500, %v511
      %v515 = vmul.f32 %v501, %v511
      %v516 = vmul.f32 %v502, %v511
      %v517 = vmul.f32 %v503, %v511
      %v518 = vmul.f32 %v504, %v511
      %v519 = vmul.f32 %v505, %v511
      %v520 = vmul.f32 %v506, %v511
      %v522 = vlaneseq
      %v523 = vshrl.u32 %v522, 7
      %v524 = vsub.s32 0, %v523
      %v525 = vrot.slane %v489, %v524
      %v527 = vadd.f32 %v513, %v525
      %v528 = vadd.f32 %v514, %v525
      %v529 = vadd.f32 %v515, %v525
      %v530 = vadd.f32 %v516, %v525
      %v531 = vadd.f32 %v517, %v525
      %v532 = vadd.f32 %v518, %v525
      %v533 = vadd.f32 %v519, %v525
      %v534 = vadd.f32 %v520, %v525
      %v535 = vsub.f32 %v287, %v431
      %v536 = vsub.f32 %v289, %v432
      %v537 = vsub.f32 %v291, %v433
      %v538 = vsub.f32 %v293, %v434
      %v539 = vsub.f32 %v295, %v435
      %v540 = vsub.f32 %v297, %v436
      %v541 = vsub.f32 %v299, %v437
      %v542 = vsub.f32 %v301, %v438
      %v543 = vmul.f32 %v535, %v479
      %v544 = vmul.f32 %v536, %v480
      %v545 = vmul.f32 %v537, %v481
      %v546 = vmul.f32 %v538, %v482
      %v547 = vmul.f32 %v539, %v483
      %v548 = vmul.f32 %v540, %v484
      %v549 = vmul.f32 %v541, %v485
      %v550 = vmul.f32 %v542, %v486
      %v552 = vlaneseq
      %v553 = vshrl.u32 %v552, 7
      %v554 = vsub.s32 0, %v553
      %v555 = vrot.slane %v488, %v554
      %v557 = vmul.f32 %v543, %v555
      %v558 = vmul.f32 %v544, %v555
      %v559 = vmul.f32 %v545, %v555
      %v560 = vmul.f32 %v546, %v555
      %v561 = vmul.f32 %v547, %v555
      %v562 = vmul.f32 %v548, %v555
      %v563 = vmul.f32 %v549, %v555
      %v564 = vmul.f32 %v550, %v555
      %v566 = vlaneseq
      %v567 = vshrl.u32 %v566, 7
      %v568 = vsub.s32 0, %v567
      %v569 = vrot.slane %v490, %v568
      %v571 = vadd.f32 %v557, %v569
      %v572 = vadd.f32 %v558, %v569
      %v573 = vadd.f32 %v559, %v569
      %v574 = vadd.f32 %v560, %v569
      %v575 = vadd.f32 %v561, %v569
      %v576 = vadd.f32 %v562, %v569
      %v577 = vadd.f32 %v563, %v569
      %v578 = vadd.f32 %v564, %v569
      %v579 = vpack.c.bf16 %v527, %v527
      %v580 = vpack.c.bf16 %v528, %v528
      %v581 = vpack.c.bf16 %v529, %v529
      %v582 = vpack.c.bf16 %v530, %v530
      %v583 = vpack.c.bf16 %v531, %v531
      %v584 = vpack.c.bf16 %v532, %v532
      %v585 = vpack.c.bf16 %v533, %v533
      %v586 = vpack.c.bf16 %v534, %v534
      %v587 = vpack.c.bf16 %v571, %v571
      %v588 = vpack.c.bf16 %v572, %v572
      %v589 = vpack.c.bf16 %v573, %v573
      %v590 = vpack.c.bf16 %v574, %v574
      %v591 = vpack.c.bf16 %v575, %v575
      %v592 = vpack.c.bf16 %v576, %v576
      %v593 = vpack.c.bf16 %v577, %v577
      %v594 = vpack.c.bf16 %v578, %v578
      %v595 = vld [vmem:[%s5] sm:$0xf]
      %v596 = vld [vmem:[%s6] sm:$0xf]
      %v605 = vunpack.c.l.b16 %v587
      %v606 = vunpack.c.l.b16 %v588
      %v607 = vunpack.c.l.b16 %v589
      %v608 = vunpack.c.l.b16 %v590
      %v609 = vunpack.c.l.b16 %v591
      %v610 = vunpack.c.l.b16 %v592
      %v611 = vunpack.c.l.b16 %v593
      %v612 = vunpack.c.l.b16 %v594
      %v613 = vpack.c.b16 %v606, %v605
      %v614 = vpack.c.b16 %v608, %v607
      %v615 = vpack.c.b16 %v610, %v609
      %v616 = vpack.c.b16 %v612, %v611
      %v618 = vsel %vm302, %v613, 0
      %v621 = vsel %vm302, %v614, 0
      %v624 = vsel %vm302, %v615, 0
      %v627 = vsel %vm302, %v616, 0
      %vm629 = vcmask 1043456
      %v631 = vsel %vm629, %v596, 0
      %633 = vmatprep.subr.bf16.mxu0 0
      %634 = vmatpush1.bf16.msra.mxu0 0
      %635 = vmatprep.subr.bf16.mxu0 0
      %636 = vmatpush1.bf16.msra.mxu0 0
      %637 = vmatprep.subr.bf16.mxu0 0
      %638 = vmatpush1.bf16.msra.mxu0 0
      %639 = vmatprep.subr.bf16.mxu0 0
      %640 = vmatpush1.bf16.msra.mxu0 0
      %641 = vmatprep.subr.bf16.mxu0 0
      %642 = vmatpush1.bf16.msra.mxu0 0
      %643 = vmatprep.subr.bf16.mxu0 0
      %644 = vmatpush1.bf16.msra.mxu0 0
      %645 = vmatprep.subr.bf16.mxu0 0
      %646 = vmatpush1.bf16.msra.mxu0 0
      %647 = vmatprep.subr.bf16.mxu0 0
      %648 = vmatpush1.bf16.msra.mxu0 %v631
      %649 = vmatprep.subr.bf16.mxu0 0
      %650 = vmatpush2.bf16.msra.mxu0 0
      %651 = vmatprep.subr.bf16.mxu0 0
      %652 = vmatpush2.bf16.msra.mxu0 0
      %653 = vmatprep.subr.bf16.mxu0 0
      %654 = vmatpush2.bf16.msra.mxu0 0
      %655 = vmatprep.subr.bf16.mxu0 0
      %656 = vmatpush2.bf16.msra.mxu0 0
      %657 = vmatprep.subr.bf16.mxu0 0
      %658 = vmatpush2.bf16.msra.mxu0 0
      %659 = vmatprep.subr.bf16.mxu0 0
      %660 = vmatpush2.bf16.msra.mxu0 0
      %661 = vmatprep.subr.bf16.mxu0 0
      %662 = vmatpush2.bf16.msra.mxu0 0
      %663 = vmatprep.subr.bf16.mxu0 0
      %664 = vmatpush2.bf16.msra.mxu0 0
      %665 = vmatprep.mubr.bf16.mxu0 0
      %666 = vmatmul.mubr.bf16.gmra.mxu0 %v618
      %v667 = vpop.f32.mrf.mxu0
      %v668 = vadd.f32 0.0, %v667
      %v669 = vpop.f32.mrf.mxu0
      %v670 = vpop.f32.mrf.mxu0
      %v671 = vadd.f32 0.0, %v670
      %v672 = vpop.f32.mrf.mxu0
      %673 = vmatprep.mubr.bf16.mxu0 0
      %674 = vmatmul.mubr.bf16.gmra.mxu0 %v621
      %v675 = vpop.f32.mrf.mxu0
      %v676 = vadd.f32 0.0, %v675
      %v677 = vpop.f32.mrf.mxu0
      %v678 = vpop.f32.mrf.mxu0
      %v679 = vadd.f32 0.0, %v678
      %v680 = vpop.f32.mrf.mxu0
      %681 = vmatprep.mubr.bf16.mxu0 0
      %682 = vmatmul.mubr.bf16.gmra.mxu0 %v624
      %v683 = vpop.f32.mrf.mxu0
      %v684 = vadd.f32 0.0, %v683
      %v685 = vpop.f32.mrf.mxu0
      %v686 = vpop.f32.mrf.mxu0
      %v687 = vadd.f32 0.0, %v686
      %v688 = vpop.f32.mrf.mxu0
      %689 = vmatprep.mubr.bf16.mxu0 0
      %690 = vmatmul.mubr.bf16.gmra.mxu0 %v627
      %v691 = vpop.f32.mrf.mxu0
      %v692 = vadd.f32 0.0, %v691
      %v693 = vpop.f32.mrf.mxu0
      %v694 = vpop.f32.mrf.mxu0
      %v695 = vadd.f32 0.0, %v694
      %v696 = vpop.f32.mrf.mxu0
      %697 = vdwg.mxu0
      %v706 = vunpack.c.l.b16 %v579
      %v707 = vunpack.c.l.b16 %v580
      %v708 = vunpack.c.l.b16 %v581
      %v709 = vunpack.c.l.b16 %v582
      %v710 = vunpack.c.l.b16 %v583
      %v711 = vunpack.c.l.b16 %v584
      %v712 = vunpack.c.l.b16 %v585
      %v713 = vunpack.c.l.b16 %v586
      %v714 = vpack.c.b16 %v707, %v706
      %v715 = vpack.c.b16 %v709, %v708
      %v716 = vpack.c.b16 %v711, %v710
      %v717 = vpack.c.b16 %v713, %v712
      %v719 = vsel %vm302, %v714, 0
      %v722 = vsel %vm302, %v715, 0
      %v725 = vsel %vm302, %v716, 0
      %v728 = vsel %vm302, %v717, 0
      %v731 = vsel %vm629, %v595, 0
      %733 = vmatprep.subr.bf16.mxu0 0
      %734 = vmatpush1.bf16.msra.mxu0 0
      %735 = vmatprep.subr.bf16.mxu0 0
      %736 = vmatpush1.bf16.msra.mxu0 0
      %737 = vmatprep.subr.bf16.mxu0 0
      %738 = vmatpush1.bf16.msra.mxu0 0
      %739 = vmatprep.subr.bf16.mxu0 0
      %740 = vmatpush1.bf16.msra.mxu0 0
      %741 = vmatprep.subr.bf16.mxu0 0
      %742 = vmatpush1.bf16.msra.mxu0 0
      %743 = vmatprep.subr.bf16.mxu0 0
      %744 = vmatpush1.bf16.msra.mxu0 0
      %745 = vmatprep.subr.bf16.mxu0 0
      %746 = vmatpush1.bf16.msra.mxu0 0
      %747 = vmatprep.subr.bf16.mxu0 0
      %748 = vmatpush1.bf16.msra.mxu0 %v731
      %749 = vmatprep.subr.bf16.mxu0 0
      %750 = vmatpush2.bf16.msra.mxu0 0
      %751 = vmatprep.subr.bf16.mxu0 0
      %752 = vmatpush2.bf16.msra.mxu0 0
      %753 = vmatprep.subr.bf16.mxu0 0
      %754 = vmatpush2.bf16.msra.mxu0 0
      %755 = vmatprep.subr.bf16.mxu0 0
      %756 = vmatpush2.bf16.msra.mxu0 0
      %757 = vmatprep.subr.bf16.mxu0 0
      %758 = vmatpush2.bf16.msra.mxu0 0
      %759 = vmatprep.subr.bf16.mxu0 0
      %760 = vmatpush2.bf16.msra.mxu0 0
      %761 = vmatprep.subr.bf16.mxu0 0
      %762 = vmatpush2.bf16.msra.mxu0 0
      %763 = vmatprep.subr.bf16.mxu0 0
      %764 = vmatpush2.bf16.msra.mxu0 0
      %765 = vmatprep.mubr.bf16.mxu0 0
      %766 = vmatmul.mubr.bf16.gmra.mxu0 %v719
      %v767 = vpop.f32.mrf.mxu0
      %v768 = vadd.f32 %v668, %v767
      %v769 = vpop.f32.mrf.mxu0
      %v770 = vpop.f32.mrf.mxu0
      %v771 = vadd.f32 %v671, %v770
      %v772 = vpop.f32.mrf.mxu0
      %773 = vmatprep.mubr.bf16.mxu0 0
      %774 = vmatmul.mubr.bf16.gmra.mxu0 %v722
      %v775 = vpop.f32.mrf.mxu0
      %v776 = vadd.f32 %v676, %v775
      %v777 = vpop.f32.mrf.mxu0
      %v778 = vpop.f32.mrf.mxu0
      %v779 = vadd.f32 %v679, %v778
      %v780 = vpop.f32.mrf.mxu0
      %781 = vmatprep.mubr.bf16.mxu0 0
      %782 = vmatmul.mubr.bf16.gmra.mxu0 %v725
      %v783 = vpop.f32.mrf.mxu0
      %v784 = vadd.f32 %v684, %v783
      %v785 = vpop.f32.mrf.mxu0
      %v786 = vpop.f32.mrf.mxu0
      %v787 = vadd.f32 %v687, %v786
      %v788 = vpop.f32.mrf.mxu0
      %789 = vmatprep.mubr.bf16.mxu0 0
      %790 = vmatmul.mubr.bf16.gmra.mxu0 %v728
      %v791 = vpop.f32.mrf.mxu0
      %v792 = vadd.f32 %v692, %v791
      %v793 = vpop.f32.mrf.mxu0
      %v794 = vpop.f32.mrf.mxu0
      %v795 = vadd.f32 %v695, %v794
      %v796 = vpop.f32.mrf.mxu0
      %797 = vdwg.mxu0
      %798 = vst.msk [vmem:[%s283] sm:$0xff] %vm302, %v768
      %799 = vst.msk [vmem:[%s283 + $0x8] sm:$0xff] %vm302, %v771
      %800 = vst.msk [vmem:[%s283 + $0x10] sm:$0xff] %vm302, %v776
      %801 = vst.msk [vmem:[%s283 + $0x18] sm:$0xff] %vm302, %v779
      %802 = vst.msk [vmem:[%s283 + $0x20] sm:$0xff] %vm302, %v784
      %803 = vst.msk [vmem:[%s283 + $0x28] sm:$0xff] %vm302, %v787
      %804 = vst.msk [vmem:[%s283 + $0x30] sm:$0xff] %vm302, %v792
      %805 = vst.msk [vmem:[%s283 + $0x38] sm:$0xff] %vm302, %v795
      %s806 = smul.u32 8, %s18
      %p807 = scmp.lt.s32.totalorder %s806, 15
      %s808 = scalar_select %p807, %s806, 15
      %s809 = smul.addr %s808, 8
      %s810 = scalar_lea.vmem %s7, %s809
      // Predicated region
      $region49: #{tpu_custom_call.1} parent=47 // pred_check
        %p811 = pneg %p188
      $region50: #{tpu_custom_call.1} parent=47 // pred_check_branch
        %813 = sbr.rel (%p811) target = $region52
      $region51: #{tpu_custom_call.1} parent=47 // pred_region
        %s814 = smul.u32 8, %s18
      $region52: #{tpu_custom_call.1} parent=47 // pred_fallthru
        _
    $region48: #{tpu_custom_call.1} parent=5 // pred_fallthru
      _
    %p815 = scmp.le.s32.totalorder 2, %s13
    // Predicated region
    $region53: #{tpu_custom_call.1} parent=5 // pred_check
      %p816 = pneg %p815
    $region54: #{tpu_custom_call.1} parent=5 // pred_check_branch
      %818 = sbr.rel (%p816) target = $region56
    $region55: #{tpu_custom_call.1} parent=5 // pred_region
      %s819 = ssub.s32 %s13, 2
      // Predicated region
      $region57: #{tpu_custom_call.1} parent=55 // pred_check
        %p820 = pneg %p194
      $region58: #{tpu_custom_call.1} parent=55 // pred_check_branch
        %822 = sbr.rel (%p820) target = $region60
      $region59: #{tpu_custom_call.1} parent=55 // pred_region
        %s823 = smul.u32 8, %s19
        %p824 = scmp.lt.s32.totalorder %s823, 15
        %s825 = scalar_select %p824, %s823, 15
        %s826 = smul.addr %s825, 8
        %s827 = scalar_lea.vmem %s7, %s826
      $region60: #{tpu_custom_call.1} parent=55 // pred_fallthru
        _
    $region56: #{tpu_custom_call.1} parent=5 // pred_fallthru
      _
  $region6: #{tpu_custom_call.1} parent=0 // loop_footer
    %s17 = sadd.s32 1, %s13
  $region7: #{tpu_custom_call.1} parent=0 // loop_footer_branch
    %12 = sbr.rel target = $region3
  $region8: #{tpu_custom_call.1} parent=0 // loop_exit
    _

</llo_original>
